<compile_context>
chip_gen: v7x
topology: tpu7x:2x2x1
jax: 0.10.0
libtpu: 0.0.40
codegen_flags: <defaults>
</compile_context>

<pallas_src>
import functools

import jax
import jax.numpy as jnp
from jax.experimental import pallas as pl
from jax.experimental.pallas import tpu as pltpu


def _enc_kernel(y_ref, w1_ref, b1_ref, w23_ref, b23_ref, mu_ref, sigma_ref,
                *, latent_dim, matmul_dtype, activation_dtype):
    # In-kernel cast of the streamed y tile to the MXU input dtype (bf16).
    y = y_ref[...].astype(matmul_dtype)

    # Hidden layer: bf16 MXU matmul, f32 accumulation, bias + SiLU.
    h = jnp.dot(y, w1_ref[...], preferred_element_type=jnp.float32)
    h = h + b1_ref[...]
    h = h.astype(activation_dtype)
    e = h * jax.nn.sigmoid(h)                      # SiLU (VPU + EUP)

    # Fused heads: single [H, 2L] matmul -> [tb, 2L] f32 accumulator.
    c = jnp.dot(e.astype(w23_ref.dtype), w23_ref[...],
                preferred_element_type=jnp.float32)
    c = c + b23_ref[...]

    # Split in-kernel: first L lanes -> mu, second L lanes -> softplus + 1e-6.
    mu_ref[...] = c[:, :latent_dim].astype(mu_ref.dtype)
    sigma_ref[...] = (jnp.logaddexp(c[:, latent_dim:], 0.0) + 1e-6
                      ).astype(sigma_ref.dtype)


def _pick_tb(batch, cap=4096):
    """Largest power-of-two divisor of `batch`, capped at `cap`, and capped at
    batch//2 when batch >= 16 so v7x gets >= 2 parallel grid steps."""
    limit = cap if batch < 16 else min(cap, batch // 2)
    best = None
    t = 8
    while t <= limit:
        if batch % t == 0:
            best = t
        t *= 2
    return best if best is not None else batch


def prepare_enc_params(params, *, matmul_dtype=jnp.bfloat16):
    """One-time parameter prep: fuse the two heads and cast matmul operands.

    Do this once (outside the per-step call path) and reuse the result.
    """
    w1, b1, w2, b2, w3, b3 = params
    w23 = jnp.concatenate([w2, w3], axis=1)        # [H, 2L]
    b23 = jnp.concatenate([b2, b3], axis=1)        # [1, 2L]
    return (w1.astype(matmul_dtype), b1.astype(jnp.float32),
            w23.astype(matmul_dtype), b23.astype(jnp.float32))


def enc_forward(y, prepared_params, *, tb=None, out_dtype=jnp.float32,
                activation_dtype=jnp.float32):
    """Enc forward pass as a single Pallas kernel, tiled over batch.

    `prepared_params` comes from `prepare_enc_params`.  Returns (mu, sigma),
    each [batch, latent_dim] in `out_dtype`.
    """
    w1_c, b1_f, w23_c, b23_f = prepared_params
    B, D = y.shape
    H = w1_c.shape[1]
    L = w23_c.shape[1] // 2

    if tb is None:
        tb = _pick_tb(B)
    assert B % tb == 0, f"batch {B} must be divisible by tile {tb}"
    grid = (B // tb,)

    # Small weights/biases: constant index_map -> resident in VMEM.
    full2d = lambda shape: pl.BlockSpec(shape, lambda i: (0, 0))

    mu, sigma = pl.pallas_call(
        functools.partial(_enc_kernel, latent_dim=L,
                          matmul_dtype=w1_c.dtype,
                          activation_dtype=activation_dtype),
        out_shape=(jax.ShapeDtypeStruct((B, L), out_dtype),
                   jax.ShapeDtypeStruct((B, L), out_dtype)),
        grid_spec=pltpu.PrefetchScalarGridSpec(
            num_scalar_prefetch=0,
            grid=grid,
            in_specs=[
                pl.BlockSpec((tb, D), lambda i: (i, 0)),  # y tile (f32, streamed)
                full2d((D, H)),                            # W1 (bf16, resident)
                full2d((1, H)),                            # b1 (f32)
                full2d((H, 2 * L)),                        # fused W23 (bf16)
                full2d((1, 2 * L)),                        # fused b23 (f32)
            ],
            out_specs=[
                pl.BlockSpec((tb, L), lambda i: (i, 0)),   # mu
                pl.BlockSpec((tb, L), lambda i: (i, 0)),   # sigma
            ],
        ),
        compiler_params=pltpu.CompilerParams(
            dimension_semantics=("parallel",),
            vmem_limit_bytes=32 << 20),
    )(y, w1_c, b1_f, w23_c, b23_f)

    return mu, sigma


def init_params(key, observation_dim, latent_dim):
    """Deterministic synthetic parameters matching Enc.__init__ shapes."""
    hidden = latent_dim * 10
    k1, k2, k3, k4, k5, k6 = jax.random.split(key, 6)
    scale1 = 1.0 / jnp.sqrt(observation_dim)
    scale2 = 1.0 / jnp.sqrt(hidden)
    w1 = jax.random.normal(k1, (observation_dim, hidden), jnp.float32) * scale1
    b1 = jax.random.normal(k2, (1, hidden), jnp.float32) * scale1
    w2 = jax.random.normal(k3, (hidden, latent_dim), jnp.float32) * scale2
    b2 = jax.random.normal(k4, (1, latent_dim), jnp.float32) * scale2
    w3 = jax.random.normal(k5, (hidden, latent_dim), jnp.float32) * scale2
    b3 = jax.random.normal(k6, (1, latent_dim), jnp.float32) * scale2
    return (w1, b1, w2, b2, w3, b3)


def enc_reference(y, params):
    """Plain-JAX f32 reference matching the PyTorch forward."""
    w1, b1, w2, b2, w3, b3 = params
    h = y @ w1 + b1
    e = h * jax.nn.sigmoid(h)
    mu = e @ w2 + b2
    sig = jax.nn.softplus(e @ w3 + b3) + 1e-6
    return mu, sig


if __name__ == "__main__":
    key = jax.random.PRNGKey(0)
    observation_dim = 32
    latent_dim = 16           # hidden = latent_dim * 10 = 160
    batch = 8

    pkey, xkey = jax.random.split(key)
    params = init_params(pkey, observation_dim, latent_dim)
    y = jax.random.normal(xkey, (batch, observation_dim), jnp.float32)

    # One-time parameter prep (head fusion + bf16 casts) outside the call path.
    prepared = prepare_enc_params(params)

    mu, sig = enc_forward(y, prepared)
    jax.block_until_ready((mu, sig))

    mu_ref, sig_ref = enc_reference(y, params)
    # bf16 matmul inputs with f32 accumulation -> ~1e-2-scale agreement vs f32 ref.
    assert mu.shape == (batch, latent_dim) and sig.shape == (batch, latent_dim)
    assert jnp.allclose(mu, mu_ref, atol=2e-2, rtol=2e-2), "mu mismatch"
    assert jnp.allclose(sig, sig_ref, atol=2e-2, rtol=2e-2), "sigma mismatch"
    assert bool(jnp.all(sig > 0.0)), "sigma must be positive"

    print("KERNEL_OK")
</pallas_src>

<mosaic_0001>
module attributes {stable_mosaic.version = 11 : i64} {
  func.func @_enc_kernel(%arg0: i32, %arg1: memref<8x32xf32, #tpu.memory_space<vmem>>, %arg2: memref<32x160xbf16, #tpu.memory_space<vmem>>, %arg3: memref<1x160xf32, #tpu.memory_space<vmem>>, %arg4: memref<160x32xbf16, #tpu.memory_space<vmem>>, %arg5: memref<1x32xf32, #tpu.memory_space<vmem>>, %arg6: memref<8x16xf32, #tpu.memory_space<vmem>>, %arg7: memref<8x16xf32, #tpu.memory_space<vmem>>) attributes {dimension_semantics = [#tpu.dimension_semantics<parallel>], iteration_bounds = array<i64: 1>, scalar_prefetch = 0 : i64, scratch_operands = 0 : i64, tpu.core_type = #tpu.core_type<tc>, window_params = [{transform_indices = @transform_0, window_bounds = array<i64: 8, 32>}, {pipeline_mode = #tpu.pipeline_mode<synchronous>, transform_indices = @transform_1, window_bounds = array<i64: 32, 160>}, {pipeline_mode = #tpu.pipeline_mode<synchronous>, transform_indices = @transform_2, window_bounds = array<i64: 1, 160>}, {pipeline_mode = #tpu.pipeline_mode<synchronous>, transform_indices = @transform_3, window_bounds = array<i64: 160, 32>}, {pipeline_mode = #tpu.pipeline_mode<synchronous>, transform_indices = @transform_4, window_bounds = array<i64: 1, 32>}, {transform_indices = @transform_5, window_bounds = array<i64: 8, 16>}, {transform_indices = @transform_6, window_bounds = array<i64: 8, 16>}]} {
    %c0 = arith.constant 0 : index
    %c0_0 = arith.constant 0 : index
    %0 = vector.load %arg1[%c0, %c0_0] : memref<8x32xf32, #tpu.memory_space<vmem>>, vector<8x32xf32>
    %1 = arith.truncf %0 : vector<8x32xf32> to vector<8x32xbf16>
    %c0_1 = arith.constant 0 : index
    %c0_2 = arith.constant 0 : index
    %2 = vector.load %arg2[%c0_1, %c0_2] : memref<32x160xbf16, #tpu.memory_space<vmem>>, vector<32x160xbf16>
    %cst = arith.constant dense<0.000000e+00> : vector<8x160xf32>
    %3 = tpu.matmul %1, %2, %cst {dimension_numbers = #tpu.dot_dimension_numbers<[1], [0], [0], [1], [0, 0, 1, 1], [], []>} : vector<8x32xbf16>, vector<32x160xbf16>, vector<8x160xf32> -> vector<8x160xf32>
    %c0_3 = arith.constant 0 : index
    %c0_4 = arith.constant 0 : index
    %4 = vector.load %arg3[%c0_3, %c0_4] : memref<1x160xf32, #tpu.memory_space<vmem>>, vector<1x160xf32>
    %5 = vector.broadcast %4 : vector<1x160xf32> to vector<8x160xf32>
    %6 = arith.addf %3, %5 : vector<8x160xf32>
    %7 = arith.negf %6 : vector<8x160xf32>
    %8 = math.exp %7 : vector<8x160xf32>
    %cst_5 = arith.constant 1.000000e+00 : f32
    %9 = vector.broadcast %cst_5 : f32 to vector<8x160xf32>
    %10 = arith.addf %9, %8 : vector<8x160xf32>
    %11 = arith.divf %9, %10 : vector<8x160xf32>
    %12 = arith.mulf %6, %11 : vector<8x160xf32>
    %13 = arith.truncf %12 : vector<8x160xf32> to vector<8x160xbf16>
    %c0_6 = arith.constant 0 : index
    %c0_7 = arith.constant 0 : index
    %14 = vector.load %arg4[%c0_6, %c0_7] : memref<160x32xbf16, #tpu.memory_space<vmem>>, vector<160x32xbf16>
    %cst_8 = arith.constant dense<0.000000e+00> : vector<8x32xf32>
    %15 = tpu.matmul %13, %14, %cst_8 {dimension_numbers = #tpu.dot_dimension_numbers<[1], [0], [0], [1], [0, 0, 1, 1], [], []>} : vector<8x160xbf16>, vector<160x32xbf16>, vector<8x32xf32> -> vector<8x32xf32>
    %c0_9 = arith.constant 0 : index
    %c0_10 = arith.constant 0 : index
    %16 = vector.load %arg5[%c0_9, %c0_10] : memref<1x32xf32, #tpu.memory_space<vmem>>, vector<1x32xf32>
    %17 = vector.broadcast %16 : vector<1x32xf32> to vector<8x32xf32>
    %18 = arith.addf %15, %17 : vector<8x32xf32>
    %19 = vector.extract_strided_slice %18 {offsets = [0, 0], sizes = [8, 16], strides = [1, 1]} : vector<8x32xf32> to vector<8x16xf32>
    %c0_11 = arith.constant 0 : index
    %c0_12 = arith.constant 0 : index
    %20 = vector.load %arg6[%c0_11, %c0_12] : memref<8x16xf32, #tpu.memory_space<vmem>>, vector<8x16xf32>
    tpu.vector_store %arg6[%c0_11, %c0_12], %19 {strides = array<i32>} : memref<8x16xf32, #tpu.memory_space<vmem>>, vector<8x16xf32>,
    %21 = vector.extract_strided_slice %18 {offsets = [0, 16], sizes = [8, 16], strides = [1, 1]} : vector<8x32xf32> to vector<8x16xf32>
    %cst_13 = arith.constant 0.000000e+00 : f32
    %22 = vector.broadcast %cst_13 : f32 to vector<8x16xf32>
    %23 = arith.maximumf %21, %22 : vector<8x16xf32>
    %24 = vector.broadcast %cst_13 : f32 to vector<8x16xf32>
    %25 = arith.subf %21, %24 : vector<8x16xf32>
    %26 = arith.cmpf one, %25, %25 : vector<8x16xf32>
    %27 = vector.broadcast %cst_13 : f32 to vector<8x16xf32>
    %28 = arith.addf %21, %27 : vector<8x16xf32>
    %29 = math.absf %25 : vector<8x16xf32>
    %cst_14 = arith.constant 0.000000e+00 : f32
    %30 = vector.broadcast %cst_14 : f32 to vector<8x16xf32>
    %31 = arith.subf %30, %29 : vector<8x16xf32>
    %32 = math.exp %31 : vector<8x16xf32>
    %33 = math.log1p %32 : vector<8x16xf32>
    %34 = arith.addf %23, %33 : vector<8x16xf32>
    %35 = arith.select %26, %28, %34 : vector<8x16xi1>, vector<8x16xf32>
    %cst_15 = arith.constant 9.99999997E-7 : f32
    %36 = vector.broadcast %cst_15 : f32 to vector<8x16xf32>
    %37 = arith.addf %35, %36 : vector<8x16xf32>
    %c0_16 = arith.constant 0 : index
    %c0_17 = arith.constant 0 : index
    %38 = vector.load %arg7[%c0_16, %c0_17] : memref<8x16xf32, #tpu.memory_space<vmem>>, vector<8x16xf32>
    tpu.vector_store %arg7[%c0_16, %c0_17], %37 {strides = array<i32>} : memref<8x16xf32, #tpu.memory_space<vmem>>, vector<8x16xf32>,
    return
  }
  func.func @transform_0(%arg0: i32) -> (i32, i32) {
    %c0_i32 = arith.constant 0 : i32
    %c0_i32_0 = arith.constant 0 : i32
    return %arg0, %c0_i32 : i32, i32
  }
  func.func @transform_1(%arg0: i32) -> (i32, i32) {
    %c0_i32 = arith.constant 0 : i32
    %c0_i32_0 = arith.constant 0 : i32
    %c0_i32_1 = arith.constant 0 : i32
    return %c0_i32, %c0_i32_0 : i32, i32
  }
  func.func @transform_2(%arg0: i32) -> (i32, i32) {
    %c0_i32 = arith.constant 0 : i32
    %c0_i32_0 = arith.constant 0 : i32
    %c0_i32_1 = arith.constant 0 : i32
    return %c0_i32, %c0_i32_0 : i32, i32
  }
  func.func @transform_3(%arg0: i32) -> (i32, i32) {
    %c0_i32 = arith.constant 0 : i32
    %c0_i32_0 = arith.constant 0 : i32
    %c0_i32_1 = arith.constant 0 : i32
    return %c0_i32, %c0_i32_0 : i32, i32
  }
  func.func @transform_4(%arg0: i32) -> (i32, i32) {
    %c0_i32 = arith.constant 0 : i32
    %c0_i32_0 = arith.constant 0 : i32
    %c0_i32_1 = arith.constant 0 : i32
    return %c0_i32, %c0_i32_0 : i32, i32
  }
  func.func @transform_5(%arg0: i32) -> (i32, i32) {
    %c0_i32 = arith.constant 0 : i32
    %c0_i32_0 = arith.constant 0 : i32
    return %arg0, %c0_i32 : i32, i32
  }
  func.func @transform_6(%arg0: i32) -> (i32, i32) {
    %c0_i32 = arith.constant 0 : i32
    %c0_i32_0 = arith.constant 0 : i32
    return %arg0, %c0_i32 : i32, i32
  }
}

</mosaic_0001>

<llo_original>
// kernel: tpu_custom_call.1
$region0: #{tpu_custom_call.1}
  #allocation0 [shape = 'u32[]', space=smem, size = 0x4, offset = 0x4, fixed_abs, tag = 'smem constant byte address 0x4 - core index']
  #allocation1 [shape = 'u32[144,128]{1,0:T(1,128)}', space=vmem, size = 0x12000, scoped, tag = 'internal scratch']
  %s0 = inlined_call_operand.vmem [shape: f32[8,32], index: 0, kind: input, shape index: {}]
  %s1 = inlined_call_operand.vmem [shape: bf16[32,160], index: 1, kind: input, shape index: {}]
  %s2 = inlined_call_operand.vmem [shape: f32[1,160], index: 2, kind: input, shape index: {}]
  %s3 = inlined_call_operand.vmem [shape: bf16[160,32], index: 3, kind: input, shape index: {}]
  %s4 = inlined_call_operand.vmem [shape: f32[1,32], index: 4, kind: input, shape index: {}]
  %s5 = inlined_call_operand.hbm [shape: f32[8,16], index: 5, kind: output, shape index: {0}]
  %s6 = inlined_call_operand.hbm [shape: f32[8,16], index: 6, kind: output, shape index: {1}]
  %7 = xla_tuple %s5, %s6
  %s8 = sld [smem:[#allocation0]]
  $region38: #{tpu_custom_call.1} parent=0
    _
  %s10 = ssub.s32 1, %s8
  %s11 = scalar_select 0, %s10, %s8
  $region1: #{tpu_custom_call.1} parent=0
    #allocation2 [shape = 'u8[4096]{0}', space=vmem, size = 0x1000, scoped, tag = 'output window, operand 0, single buffered']
    #allocation3 [shape = 's32[1]{0}', space=sflag, size = 0x4, scoped, tag = 'scoped memory for tpu_custom_call.1']
    #allocation4 [shape = 'u8[4096]{0}', space=vmem, size = 0x1000, scoped, tag = 'output window, operand 1, single buffered']
    #allocation5 [shape = 's32[1]{0}', space=sflag, size = 0x4, scoped, tag = 'scoped memory for tpu_custom_call.1']
    %12 = vsyncpa [#allocation3], 0
    %13 = vsyncpa [#allocation5], 0
    // Predicated region
    $region2: #{tpu_custom_call.1} parent=1 // pred_check
      _
    $region3: #{tpu_custom_call.1} parent=1 // pred_check_branch
      %15 = sbr.rel (0) target = $region5
    $region4: #{tpu_custom_call.1} parent=1 // pred_region
      _
    $region5: #{tpu_custom_call.1} parent=1 // pred_fallthru
      _
    // Predicated region
    $region6: #{tpu_custom_call.1} parent=1 // pred_check
      _
    $region7: #{tpu_custom_call.1} parent=1 // pred_check_branch
      %17 = sbr.rel (0) target = $region9
    $region8: #{tpu_custom_call.1} parent=1 // pred_region
      _
    $region9: #{tpu_custom_call.1} parent=1 // pred_fallthru
      _
    // Predicated region
    $region10: #{tpu_custom_call.1} parent=1 // pred_check
      _
    $region11: #{tpu_custom_call.1} parent=1 // pred_check_branch
      %19 = sbr.rel (0) target = $region13
    $region12: #{tpu_custom_call.1} parent=1 // pred_region
      _
    $region13: #{tpu_custom_call.1} parent=1 // pred_fallthru
      _
    // Predicated region
    $region14: #{tpu_custom_call.1} parent=1 // pred_check
      _
    $region15: #{tpu_custom_call.1} parent=1 // pred_check_branch
      %21 = sbr.rel (0) target = $region17
    $region16: #{tpu_custom_call.1} parent=1 // pred_region
      _
    $region17: #{tpu_custom_call.1} parent=1 // pred_fallthru
      _
    // Predicated region
    $region18: #{tpu_custom_call.1} parent=1 // pred_check
      _
    $region19: #{tpu_custom_call.1} parent=1 // pred_check_branch
      %23 = sbr.rel (0) target = $region21
    $region20: #{tpu_custom_call.1} parent=1 // pred_region
      _
    $region21: #{tpu_custom_call.1} parent=1 // pred_fallthru
      _
    %v25 = vld [vmem:[%s0] sm:$0xff]
    %v26 = vpack.c.bf16 %v25, %v25
    %v27 = vld [vmem:[%s1] sm:$0xff]
    %v28 = vld [vmem:[%s1 + $0x8] sm:$0xff]
    %v29 = vld [vmem:[%s1 + $0x10] sm:$0xff]
    %v30 = vld [vmem:[%s1 + $0x18] sm:$0xff]
    %v31 = vld [vmem:[%s2] sm:$0x3]
    %v33 = vlaneseq
    %v34 = vshrl.u32 %v33, 7
    %v35 = vsub.s32 0, %v34
    %v36 = vrot.slane %v31, %v35
    %v37 = vlaneseq
    %v38 = vshrl.u32 %v37, 7
    %v39 = vsub.s32 1, %v38
    %v40 = vrot.slane %v31, %v39
    %v47 = vunpack.c.l.b16 %v27
    %v48 = vunpack.c.h.b16 %v27
    %v49 = vunpack.c.l.b16 %v28
    %v50 = vunpack.c.h.b16 %v28
    %v51 = vunpack.c.l.b16 %v29
    %v52 = vunpack.c.h.b16 %v29
    %v53 = vunpack.c.l.b16 %v30
    %v54 = vunpack.c.h.b16 %v30
    %v55 = vpack.c.b16 %v49, %v47
    %v56 = vpack.c.b16 %v50, %v48
    %v57 = vpack.c.b16 %v53, %v51
    %v58 = vpack.c.b16 %v54, %v52
    %vm63 = vcmask 261120
    %v65 = vsel %vm63, %v26, 0
    %67 = vmatprep.subr.bf16.mxu0 %v56
    %68 = vmatpush1.bf16.msra.mxu0 %v55
    %69 = vmatprep.subr.bf16.mxu0 %v58
    %70 = vmatpush1.bf16.msra.mxu0 %v57
    %71 = vmatprep.subr.bf16.mxu0 0
    %72 = vmatpush1.bf16.msra.mxu0 0
    %73 = vmatprep.subr.bf16.mxu0 0
    %74 = vmatpush1.bf16.msra.mxu0 0
    %75 = vmatprep.subr.bf16.mxu0 0
    %76 = vmatpush1.bf16.msra.mxu0 0
    %77 = vmatprep.subr.bf16.mxu0 0
    %78 = vmatpush1.bf16.msra.mxu0 0
    %79 = vmatprep.subr.bf16.mxu0 0
    %80 = vmatpush1.bf16.msra.mxu0 0
    %81 = vmatprep.subr.bf16.mxu0 0
    %82 = vmatpush1.bf16.msra.mxu0 0
    %83 = vmatprep.subr.bf16.mxu0 0
    %84 = vmatpush1.bf16.msra.mxu0 0
    %85 = vmatprep.subr.bf16.mxu0 0
    %86 = vmatpush1.bf16.msra.mxu0 0
    %87 = vmatprep.subr.bf16.mxu0 0
    %88 = vmatpush1.bf16.msra.mxu0 0
    %89 = vmatprep.subr.bf16.mxu0 0
    %90 = vmatpush1.bf16.msra.mxu0 0
    %91 = vmatprep.subr.bf16.mxu0 0
    %92 = vmatpush1.bf16.msra.mxu0 0
    %93 = vmatprep.subr.bf16.mxu0 0
    %94 = vmatpush1.bf16.msra.mxu0 0
    %95 = vmatprep.subr.bf16.mxu0 0
    %96 = vmatpush1.bf16.msra.mxu0 0
    %97 = vmatprep.subr.bf16.mxu0 0
    %98 = vmatpush1.bf16.msra.mxu0 0
    %99 = vmatprep.mubr.bf16.mxu0 0
    %100 = vmatmul.mubr.bf16.gmra.mrb[0].mxu0 %v65
    %v101 = vpop.f32.mrb[0].mxu0
    %v102 = vadd.f32 %v36, %v101
    %v103 = vpop.f32.mrb[0].mxu0
    %v104 = vadd.f32 %v40, %v103
    %v105 = vpop.f32.mrb[0].mxu0
    %v106 = vpop.f32.mrb[0].mxu0
    %107 = vdwg.mxu0
    %v108 = vxor.u32 %v102, 2147483648
    %v109 = vxor.u32 %v104, 2147483648
    %v110 = vmul.f32 %v108, 1.442695
    %v111 = vpow.pop %v110
    %v112 = vmul.f32 %v109, 1.442695
    %v113 = vpow.pop %v112
    %v114 = vadd.f32 %v111, 1.0
    %v115 = vadd.f32 %v113, 1.0
    %v116 = vrcp.pop %v114
    %v117 = vmul.f32 1.0, %v116
    %v118 = vrcp.pop %v115
    %v119 = vmul.f32 1.0, %v118
    %v120 = vmul.f32 %v102, %v117
    %v121 = vmul.f32 %v104, %v119
    %v122 = vpack.c.bf16 %v120, %v120
    %v123 = vpack.c.bf16 %v121, %v121
    %v124 = vld [vmem:[%s3] sm:$0xf]
    %v125 = vld [vmem:[%s3 + $0x4] sm:$0xf]
    %v126 = vld [vmem:[%s3 + $0x8] sm:$0xf]
    %v127 = vld [vmem:[%s3 + $0xc] sm:$0xf]
    %v128 = vld [vmem:[%s3 + $0x10] sm:$0xf]
    %v129 = vld [vmem:[%s3 + $0x14] sm:$0xf]
    %v130 = vld [vmem:[%s3 + $0x18] sm:$0xf]
    %v131 = vld [vmem:[%s3 + $0x1c] sm:$0xf]
    %v132 = vld [vmem:[%s3 + $0x20] sm:$0xf]
    %v133 = vld [vmem:[%s3 + $0x24] sm:$0xf]
    %v134 = vld [vmem:[%s3 + $0x28] sm:$0xf]
    %v135 = vld [vmem:[%s3 + $0x2c] sm:$0xf]
    %v136 = vld [vmem:[%s3 + $0x30] sm:$0xf]
    %v137 = vld [vmem:[%s3 + $0x34] sm:$0xf]
    %v138 = vld [vmem:[%s3 + $0x38] sm:$0xf]
    %v139 = vld [vmem:[%s3 + $0x3c] sm:$0xf]
    %v140 = vld [vmem:[%s3 + $0x40] sm:$0xf]
    %v141 = vld [vmem:[%s3 + $0x44] sm:$0xf]
    %v142 = vld [vmem:[%s3 + $0x48] sm:$0xf]
    %v143 = vld [vmem:[%s3 + $0x4c] sm:$0xf]
    %v144 = vld [vmem:[%s4] sm:$0x1]
    %v146 = vlaneseq
    %v147 = vshrl.u32 %v146, 7
    %v148 = vsub.s32 0, %v147
    %v149 = vrot.slane %v144, %v148
    %v171 = vunpack.c.l.b16 %v124
    %v172 = vunpack.c.l.b16 %v125
    %v173 = vunpack.c.l.b16 %v126
    %v174 = vunpack.c.l.b16 %v127
    %v175 = vunpack.c.l.b16 %v128
    %v176 = vunpack.c.l.b16 %v129
    %v177 = vunpack.c.l.b16 %v130
    %v178 = vunpack.c.l.b16 %v131
    %v179 = vunpack.c.l.b16 %v132
    %v180 = vunpack.c.l.b16 %v133
    %v181 = vunpack.c.l.b16 %v134
    %v182 = vunpack.c.l.b16 %v135
    %v183 = vunpack.c.l.b16 %v136
    %v184 = vunpack.c.l.b16 %v137
    %v185 = vunpack.c.l.b16 %v138
    %v186 = vunpack.c.l.b16 %v139
    %v187 = vunpack.c.l.b16 %v140
    %v188 = vunpack.c.l.b16 %v141
    %v189 = vunpack.c.l.b16 %v142
    %v190 = vunpack.c.l.b16 %v143
    %v191 = vpack.c.b16 %v172, %v171
    %v192 = vpack.c.b16 %v174, %v173
    %v193 = vpack.c.b16 %v176, %v175
    %v194 = vpack.c.b16 %v178, %v177
    %v195 = vpack.c.b16 %v180, %v179
    %v196 = vpack.c.b16 %v182, %v181
    %v197 = vpack.c.b16 %v184, %v183
    %v198 = vpack.c.b16 %v186, %v185
    %v199 = vpack.c.b16 %v188, %v187
    %v200 = vpack.c.b16 %v190, %v189
    %v212 = vsel %vm63, %v123, 0
    %214 = vmatprep.subr.bf16.mxu0 0
    %215 = vmatpush1.bf16.msra.mxu0 %v191
    %216 = vmatprep.subr.bf16.mxu0 0
    %217 = vmatpush1.bf16.msra.mxu0 %v192
    %218 = vmatprep.subr.bf16.mxu0 0
    %219 = vmatpush1.bf16.msra.mxu0 %v193
    %220 = vmatprep.subr.bf16.mxu0 0
    %221 = vmatpush1.bf16.msra.mxu0 %v194
    %222 = vmatprep.subr.bf16.mxu0 0
    %223 = vmatpush1.bf16.msra.mxu0 %v195
    %224 = vmatprep.subr.bf16.mxu0 0
    %225 = vmatpush1.bf16.msra.mxu0 %v196
    %226 = vmatprep.subr.bf16.mxu0 0
    %227 = vmatpush1.bf16.msra.mxu0 %v197
    %228 = vmatprep.subr.bf16.mxu0 0
    %229 = vmatpush1.bf16.msra.mxu0 %v198
    %230 = vmatprep.subr.bf16.mxu0 0
    %231 = vmatpush1.bf16.msra.mxu0 %v199
    %232 = vmatprep.subr.bf16.mxu0 0
    %233 = vmatpush1.bf16.msra.mxu0 %v200
    %234 = vmatprep.subr.bf16.mxu0 0
    %235 = vmatpush1.bf16.msra.mxu0 0
    %236 = vmatprep.subr.bf16.mxu0 0
    %237 = vmatpush1.bf16.msra.mxu0 0
    %238 = vmatprep.subr.bf16.mxu0 0
    %239 = vmatpush1.bf16.msra.mxu0 0
    %240 = vmatprep.subr.bf16.mxu0 0
    %241 = vmatpush1.bf16.msra.mxu0 0
    %242 = vmatprep.subr.bf16.mxu0 0
    %243 = vmatpush1.bf16.msra.mxu0 0
    %244 = vmatprep.subr.bf16.mxu0 0
    %245 = vmatpush1.bf16.msra.mxu0 0
    %246 = vmatprep.mubr.bf16.mxu0 %v212
    %247 = vmatmul.mubr.bf16.gmra.mrb[0].mxu0 %v122
    %v248 = vpop.f32.mrb[0].mxu0
    %v249 = vadd.f32 %v149, %v248
    %v250 = vpop.f32.mrb[0].mxu0
    %v251 = vpop.f32.mrb[0].mxu0
    %v252 = vpop.f32.mrb[0].mxu0
    %253 = vdwg.mxu0
    %vm254 = vcmask 130048
    %255 = vst.msk [vmem:[#allocation2] sm:$0xff] %vm254, %v249
    %v256 = vmax.f32 %v249, 0.0
    %vm257 = vcmp.ne.f32.partialorder %v249, %v249
    %v258 = vadd.f32 %v249, 0.0
    %v259 = vand.u32 2147483647, %v249
    %v260 = vsub.f32 0.0, %v259
    %v261 = vmul.f32 %v260, 1.442695
    %v262 = vpow.pop %v261
    %v263 = vadd.f32 %v262, 1.0
    %v264 = vlog2.pop %v263
    %v265 = vmul.f32 %v264, 0.6931472
    %v266 = vmul.f32 -0.5, %v262
    %v267 = vadd.f32 %v266, 1.0
    %v268 = vmul.f32 %v267, %v262
    %v269 = vand.u32 2147483647, %v262
    %vm270 = vcmp.lt.f32.partialorder %v269, 0.0004427343
    %v271 = vsel %vm270, %v268, %v265
    %v272 = vadd.f32 %v256, %v271
    %v273 = vsel %vm257, %v258, %v272
    %v274 = vadd.f32 %v273, 1e-06
    %276 = vrot.lane.b32.xlu0 %v274, 112
    %v277 = vpop.permute.xlu0 %276
    %279 = vst.msk [vmem:[#allocation4] sm:$0xff] %vm254, %v277
    // Predicated region
    $region22: #{tpu_custom_call.1} parent=1 // pred_check
      _
    $region23: #{tpu_custom_call.1} parent=1 // pred_check_branch
      %281 = sbr.rel (0) target = $region25
    $region24: #{tpu_custom_call.1} parent=1 // pred_region
      %s283 = ssub.s32 128, 128
      %284 = vsyncadd [#allocation3], %s283
      %s286 = sshll.u32 [#allocation2], 4
      %s287 = int_to_ptr.vmem [resolvable:$true] %s286
      %289 = dma.vmem_to_hbm [thread:$0]  %s287, 128, %s5, [#allocation3]
    $region25: #{tpu_custom_call.1} parent=1 // pred_fallthru
      _
    // Predicated region
    $region26: #{tpu_custom_call.1} parent=1 // pred_check
      _
    $region27: #{tpu_custom_call.1} parent=1 // pred_check_branch
      %291 = sbr.rel (0) target = $region29
    $region28: #{tpu_custom_call.1} parent=1 // pred_region
      %s293 = ssub.s32 128, 128
      %294 = vsyncadd [#allocation5], %s293
      %s296 = sshll.u32 [#allocation4], 4
      %s297 = int_to_ptr.vmem [resolvable:$true] %s296
      %299 = dma.vmem_to_hbm [thread:$0]  %s297, 128, %s6, [#allocation5]
    $region29: #{tpu_custom_call.1} parent=1 // pred_fallthru
      _
    // Predicated region
    $region30: #{tpu_custom_call.1} parent=1 // pred_check
      _
    $region31: #{tpu_custom_call.1} parent=1 // pred_check_branch
      %301 = sbr.rel (0) target = $region33
    $region32: #{tpu_custom_call.1} parent=1 // pred_region
      %302 = dma.done [#allocation3], 128
    $region33: #{tpu_custom_call.1} parent=1 // pred_fallthru
      _
    // Predicated region
    $region34: #{tpu_custom_call.1} parent=1 // pred_check
      _
    $region35: #{tpu_custom_call.1} parent=1 // pred_check_branch
      %304 = sbr.rel (0) target = $region37
    $region36: #{tpu_custom_call.1} parent=1 // pred_region
      %305 = dma.done [#allocation5], 128
    $region37: #{tpu_custom_call.1} parent=1 // pred_fallthru
      _
    %306 = vsyncpa [#allocation3], 1
    %307 = vsyncpa [#allocation5], 1

</llo_original>
